<compile_context>
chip_gen: v5e
topology: v5e:2x2
jax: 0.10.0
libtpu: 0.0.40
codegen_flags: <defaults>
</compile_context>

<pallas_src>
import jax
import jax.numpy as jnp
from jax import lax
from jax.experimental import pallas as pl
from jax.experimental.pallas import tpu as pltpu


def _round_up(x, m):
    return (x + m - 1) // m * m


def _gram_matrix_ref(x, cast_bf16=False):
    """Pure-JAX reference of torch gram_matrix."""
    a, b, c, d = x.shape
    feats = x.reshape(a * b, c * d)
    if cast_bf16:
        feats = feats.astype(jnp.bfloat16)
    g = lax.dot_general(
        feats, feats,
        dimension_numbers=(((1,), (1,)), ((), ())),
        preferred_element_type=jnp.float32,
    )
    return g / (a * b * c * d)


def _make_style_loss_kernel(inv_norm, inv_mm):
    def kernel(feat_ref, tgt_ref, g_ref, loss_ref):
        k = pl.program_id(0)

        @pl.when(k == 0)
        def _():
            g_ref[...] = jnp.zeros_like(g_ref)

        # bf16 features, f32 accumulation on the MXU; contract the K axis of
        # both operands directly (no transpose).
        f = feat_ref[...]
        g_ref[...] += lax.dot_general(
            f, f,
            dimension_numbers=(((1,), (1,)), ((), ())),
            preferred_element_type=jnp.float32,
        )

        @pl.when(k == pl.num_programs(0) - 1)
        def _():
            g = g_ref[...] * inv_norm           # Gram normalization
            g_ref[...] = g
            diff = g - tgt_ref[...]             # padded region: 0 - 0 = 0
            loss_ref[0] = jnp.sum(diff * diff) * inv_mm

    return kernel


def style_loss_forward(x, target_gram):
    """Mirrors StyleLoss.forward: returns (input, loss, G)."""
    a, b, c, d = x.shape
    M = a * b
    K = c * d
    inv_norm = 1.0 / float(a * b * c * d)
    inv_mm = 1.0 / float(M * M)          # true M*M, not padded

    # --- alignment / tiling -------------------------------------------------
    # M feeds both MXU output dims and the lane (last) dim of G: pad to 128.
    # (A 256 multiple fills the 2x256x256 MXU on v6e/v7x even better; 128 is
    # correct and lane-dense on every generation.)
    Mp = _round_up(M, 128)
    # K tile: lane-dense 128-multiple, capped at 2048 so that
    # 2 (double-buffer) * Mp*tk bf16 + Mp*Mp f32 accumulator + Mp*Mp f32 target
    # stays well under v7x's 32 MiB scoped / 64 MiB physical VMEM.
    tk = min(2048, _round_up(K, 128))
    Kp = _round_up(K, tk)
    n_k = Kp // tk

    feats = x.reshape(M, K).astype(jnp.bfloat16)
    feats = jnp.pad(feats, ((0, Mp - M), (0, Kp - K)))
    tgt = jnp.pad(target_gram.astype(jnp.float32),
                  ((0, Mp - M), (0, Mp - M)))

    kernel = _make_style_loss_kernel(inv_norm, inv_mm)

    # Note: for very large channel counts (Mp >> 512) the next step would be
    # (i, j) output tiling with Gram symmetry (compute only j >= i blocks) and
    # "parallel" output axes for v7x's two TensorCores.
    g_pad, loss = pl.pallas_call(
        kernel,
        out_shape=(
            jax.ShapeDtypeStruct((Mp, Mp), jnp.float32),  # Gram (padded)
            jax.ShapeDtypeStruct((1,), jnp.float32),      # scalar loss (SMEM)
        ),
        grid_spec=pltpu.PrefetchScalarGridSpec(
            num_scalar_prefetch=0,
            grid=(n_k,),
            in_specs=[
                pl.BlockSpec((Mp, tk), lambda k: (0, k)),  # K-tiled features
                pl.BlockSpec((Mp, Mp), lambda k: (0, 0)),  # resident target
            ],
            out_specs=(
                pl.BlockSpec((Mp, Mp), lambda k: (0, 0)),  # resident accum
                pl.BlockSpec(memory_space=pltpu.MemorySpace.SMEM),
            ),
        ),
        compiler_params=pltpu.CompilerParams(
            dimension_semantics=("arbitrary",),   # k is a reduction axis
            vmem_limit_bytes=32 * 1024 * 1024,
        ),
        cost_estimate=pl.CostEstimate(
            flops=2 * Mp * Mp * Kp,
            transcendentals=0,
            bytes_accessed=Mp * Kp * 2 + 2 * Mp * Mp * 4 + 4,
        ),
    )(feats, tgt)

    G = g_pad[:M, :M]
    # Forward returns the input unchanged (StyleLoss is a pass-through layer);
    # the loss (self.loss in PyTorch) is exposed as an extra output.
    return x, loss[0], G


if __name__ == "__main__":
    key = jax.random.PRNGKey(0)
    k_tgt, k_in = jax.random.split(key)

    # Small NCHW feature maps consistent with the module.
    a, b, c, d = 2, 4, 16, 16
    target_feature = jax.random.normal(k_tgt, (a, b, c, d), dtype=jnp.float32)
    x = jax.random.normal(k_in, (a, b, c, d), dtype=jnp.float32)

    # __init__: target = gram_matrix(target_feature).detach()  (plain-JAX glue)
    target_gram = _gram_matrix_ref(target_feature)

    out, loss, G = style_loss_forward(x, target_gram)
    jax.block_until_ready((out, loss, G))

    # Tight check against a reference that matches the kernel's precision
    # choice (bf16 features, f32 accumulation).
    G_ref_bf16 = _gram_matrix_ref(x, cast_bf16=True)
    loss_ref = jnp.mean((G_ref_bf16 - target_gram) ** 2)
    assert jnp.allclose(G, G_ref_bf16, atol=1e-4, rtol=1e-4)
    assert jnp.allclose(loss, loss_ref, atol=1e-5, rtol=1e-4)

    # Loose check against the pure-f32 semantics of the PyTorch module
    # (difference is only the bf16 rounding of the MXU inputs).
    G_f32 = _gram_matrix_ref(x)
    loss_f32 = jnp.mean((G_f32 - target_gram) ** 2)
    assert jnp.allclose(G, G_f32, atol=2e-2, rtol=2e-2)
    assert jnp.allclose(loss, loss_f32, atol=1e-3, rtol=5e-2)

    assert jnp.array_equal(out, x)
    print("KERNEL_OK")
</pallas_src>

<mosaic_0001>
module attributes {stable_mosaic.version = 11 : i64} {
  func.func @kernel(%arg0: i32, %arg1: memref<128x256xbf16, #tpu.memory_space<vmem>>, %arg2: memref<128x128xf32, #tpu.memory_space<vmem>>, %arg3: memref<128x128xf32, #tpu.memory_space<vmem>>, %arg4: memref<1xf32, #tpu.memory_space<smem>>) attributes {dimension_semantics = [#tpu.dimension_semantics<arbitrary>], iteration_bounds = array<i64: 1>, scalar_prefetch = 0 : i64, scratch_operands = 0 : i64, tpu.core_type = #tpu.core_type<tc>, window_params = [{transform_indices = @transform_0, window_bounds = array<i64: 128, 256>}, {pipeline_mode = #tpu.pipeline_mode<synchronous>, transform_indices = @transform_1, window_bounds = array<i64: 128, 128>}, {pipeline_mode = #tpu.pipeline_mode<synchronous>, transform_indices = @transform_2, window_bounds = array<i64: 128, 128>}, {transform_indices = @transform_3, window_bounds = array<i64: 1>}]} {
    %c0_i32 = arith.constant 0 : i32
    %0 = arith.cmpi eq, %arg0, %c0_i32 : i32
    %1 = arith.extui %0 : i1 to i32
    %c0_i32_0 = arith.constant 0 : i32
    %2 = arith.cmpi ne, %1, %c0_i32_0 : i32
    scf.if %2 {
      %cst_8 = arith.constant 0.000000e+00 : f32
      %11 = vector.broadcast %cst_8 : f32 to vector<128x128xf32>
      %c0_9 = arith.constant 0 : index
      %c0_10 = arith.constant 0 : index
      %12 = vector.load %arg3[%c0_9, %c0_10] : memref<128x128xf32, #tpu.memory_space<vmem>>, vector<128x128xf32>
      tpu.vector_store %arg3[%c0_9, %c0_10], %11 {strides = array<i32>} : memref<128x128xf32, #tpu.memory_space<vmem>>, vector<128x128xf32>,
    } else {
    }
    %c0 = arith.constant 0 : index
    %c0_1 = arith.constant 0 : index
    %3 = vector.load %arg1[%c0, %c0_1] : memref<128x256xbf16, #tpu.memory_space<vmem>>, vector<128x256xbf16>
    %c0_2 = arith.constant 0 : index
    %c0_3 = arith.constant 0 : index
    %4 = vector.load %arg3[%c0_2, %c0_3] : memref<128x128xf32, #tpu.memory_space<vmem>>, vector<128x128xf32>
    %cst = arith.constant dense<0.000000e+00> : vector<128x128xf32>
    %5 = tpu.matmul %3, %3, %cst {dimension_numbers = #tpu.dot_dimension_numbers<[1], [1], [0], [0], [0, 0, 1, 0], [], []>} : vector<128x256xbf16>, vector<128x256xbf16>, vector<128x128xf32> -> vector<128x128xf32>
    %6 = arith.addf %4, %5 : vector<128x128xf32>
    %c0_4 = arith.constant 0 : index
    %c0_5 = arith.constant 0 : index
    %7 = vector.load %arg3[%c0_4, %c0_5] : memref<128x128xf32, #tpu.memory_space<vmem>>, vector<128x128xf32>
    tpu.vector_store %arg3[%c0_4, %c0_5], %6 {strides = array<i32>} : memref<128x128xf32, #tpu.memory_space<vmem>>, vector<128x128xf32>,
    %c0_i32_6 = arith.constant 0 : i32
    %8 = arith.cmpi eq, %arg0, %c0_i32_6 : i32
    %9 = arith.extui %8 : i1 to i32
    %c0_i32_7 = arith.constant 0 : i32
    %10 = arith.cmpi ne, %9, %c0_i32_7 : i32
    scf.if %10 {
      %c0_8 = arith.constant 0 : index
      %c0_9 = arith.constant 0 : index
      %11 = vector.load %arg3[%c0_8, %c0_9] : memref<128x128xf32, #tpu.memory_space<vmem>>, vector<128x128xf32>
      %cst_10 = arith.constant 4.8828125E-4 : f32
      %12 = vector.broadcast %cst_10 : f32 to vector<128x128xf32>
      %13 = arith.mulf %11, %12 : vector<128x128xf32>
      %c0_11 = arith.constant 0 : index
      %c0_12 = arith.constant 0 : index
      %14 = vector.load %arg3[%c0_11, %c0_12] : memref<128x128xf32, #tpu.memory_space<vmem>>, vector<128x128xf32>
      tpu.vector_store %arg3[%c0_11, %c0_12], %13 {strides = array<i32>} : memref<128x128xf32, #tpu.memory_space<vmem>>, vector<128x128xf32>,
      %c0_13 = arith.constant 0 : index
      %c0_14 = arith.constant 0 : index
      %15 = vector.load %arg2[%c0_13, %c0_14] : memref<128x128xf32, #tpu.memory_space<vmem>>, vector<128x128xf32>
      %16 = arith.subf %13, %15 : vector<128x128xf32>
      %17 = arith.mulf %16, %16 : vector<128x128xf32>
      %18 = vector.shape_cast %17 : vector<128x128xf32> to vector<1x128x128xf32>
      %cst_15 = arith.constant dense<0.000000e+00> : vector<1xf32>
      %19 = vector.multi_reduction <add>, %18, %cst_15 [1, 2] : vector<1x128x128xf32> to vector<1xf32>
      %20 = vector.shape_cast %19 : vector<1xf32> to vector<1x1x1xf32>
      %21 = vector.extract %20[0, 0, 0] : f32 from vector<1x1x1xf32>
      %cst_16 = arith.constant 1.562500e-02 : f32
      %22 = arith.mulf %21, %cst_16 : f32
      %c0_17 = arith.constant 0 : index
      %23 = memref.load %arg4[%c0_17] : memref<1xf32, #tpu.memory_space<smem>>
      memref.store %22, %arg4[%c0_17] : memref<1xf32, #tpu.memory_space<smem>>
    } else {
    }
    return
  }
  func.func @transform_0(%arg0: i32) -> (i32, i32) {
    %c0_i32 = arith.constant 0 : i32
    %c0_i32_0 = arith.constant 0 : i32
    return %c0_i32, %arg0 : i32, i32
  }
  func.func @transform_1(%arg0: i32) -> (i32, i32) {
    %c0_i32 = arith.constant 0 : i32
    %c0_i32_0 = arith.constant 0 : i32
    %c0_i32_1 = arith.constant 0 : i32
    return %c0_i32, %c0_i32_0 : i32, i32
  }
  func.func @transform_2(%arg0: i32) -> (i32, i32) {
    %c0_i32 = arith.constant 0 : i32
    %c0_i32_0 = arith.constant 0 : i32
    %c0_i32_1 = arith.constant 0 : i32
    return %c0_i32, %c0_i32_0 : i32, i32
  }
  func.func @transform_3(%arg0: i32) -> i32 {
    %c0_i32 = arith.constant 0 : i32
    %c0_i32_0 = arith.constant 0 : i32
    return %c0_i32 : i32
  }
}

</mosaic_0001>

<llo_original>
// kernel: tpu_custom_call.1
$region0: #{tpu_custom_call.1}
  #allocation0 [shape = 'u32[]', space=smem, size = 0x4, offset = 0x4, fixed_abs, tag = 'smem constant byte address 0x4 - core index']
  #allocation1 [shape = 'u32[72,128]{1,0:T(1,128)}', space=vmem, size = 0x9000, scoped, tag = 'internal scratch']
  %s0 = inlined_call_operand.hbm [shape: bf16[128,256], index: 0, kind: input, shape index: {}]
  %s1 = inlined_call_operand.hbm [shape: f32[128,128], index: 1, kind: input, shape index: {}]
  %s2 = inlined_call_operand.hbm [shape: f32[128,128], index: 2, kind: output, shape index: {0}]
  %s3 = inlined_call_operand.hbm [shape: f32[1], index: 3, kind: output, shape index: {1}]
  %4 = xla_tuple %s2, %s3
  %s5 = sld [smem:[#allocation0]]
  $region42: #{tpu_custom_call.1} parent=0
    _
  %s7 = ssub.s32 1, %s5
  %s8 = scalar_select 0, %s7, %s5
  $region1: #{tpu_custom_call.1} parent=0
    #allocation2 [shape = 'u8[65536]{0}', space=vmem, size = 0x10000, scoped, tag = 'input window, operand 0, single buffered']
    #allocation3 [shape = 's32[1]{0}', space=sflag, size = 0x4, scoped, tag = 'scoped memory for tpu_custom_call.1']
    #allocation4 [shape = 's32[1]{0}', space=sflag, size = 0x4, scoped, tag = 'scoped memory for tpu_custom_call.1']
    #allocation5 [shape = 's32[1]{0}', space=sflag, size = 0x4, scoped, tag = 'scoped memory for tpu_custom_call.1']
    #allocation6 [shape = 'u8[65536]{0}', space=vmem, size = 0x10000, scoped, tag = 'input window, operand 1, single buffered']
    #allocation7 [shape = 's32[1]{0}', space=sflag, size = 0x4, scoped, tag = 'scoped memory for tpu_custom_call.1']
    #allocation8 [shape = 'u8[65536]{0}', space=vmem, size = 0x10000, scoped, tag = 'output window, operand 0, single buffered']
    #allocation9 [shape = 'u8[512]{0}', space=smem, size = 0x200, scoped, tag = 'output window, operand 1, single buffered']
    %9 = vsyncpa [#allocation3], 0
    %10 = vsyncpa [#allocation7], 0
    %11 = vsyncpa [#allocation4], 0
    %12 = vsyncpa [#allocation5], 0
    // Predicated region
    $region2: #{tpu_custom_call.1} parent=1 // pred_check
      _
    $region3: #{tpu_custom_call.1} parent=1 // pred_check_branch
      %14 = sbr.rel (0) target = $region5
    $region4: #{tpu_custom_call.1} parent=1 // pred_region
      %16 = vsyncadd [#allocation3], 0
      %s17 = sshll.u32 %s0, 4
      %s18 = int_to_ptr.hbm [resolvable:$true] %s17
      %s19 = sshll.u32 [#allocation2], 4
      %s20 = int_to_ptr.vmem [resolvable:$true] %s19
      %25 = dma.hbm_to_vmem [thread:$0]  %s18, 2048, %s20, [#allocation3], 128, 128, 8
    $region5: #{tpu_custom_call.1} parent=1 // pred_fallthru
      _
    // Predicated region
    $region6: #{tpu_custom_call.1} parent=1 // pred_check
      _
    $region7: #{tpu_custom_call.1} parent=1 // pred_check_branch
      %27 = sbr.rel (0) target = $region9
    $region8: #{tpu_custom_call.1} parent=1 // pred_region
      %29 = vsyncadd [#allocation7], 0
      %s30 = sshll.u32 %s1, 4
      %s31 = int_to_ptr.hbm [resolvable:$true] %s30
      %s32 = sshll.u32 [#allocation6], 4
      %s33 = int_to_ptr.vmem [resolvable:$true] %s32
      %38 = dma.hbm_to_vmem [thread:$0]  %s31, 2048, %s33, [#allocation7], 128, 128, 8
    $region9: #{tpu_custom_call.1} parent=1 // pred_fallthru
      _
    // Predicated region
    $region10: #{tpu_custom_call.1} parent=1 // pred_check
      _
    $region11: #{tpu_custom_call.1} parent=1 // pred_check_branch
      %40 = sbr.rel (0) target = $region13
    $region12: #{tpu_custom_call.1} parent=1 // pred_region
      %42 = dma.done [#allocation3], 2048
    $region13: #{tpu_custom_call.1} parent=1 // pred_fallthru
      _
    // Predicated region
    $region14: #{tpu_custom_call.1} parent=1 // pred_check
      _
    $region15: #{tpu_custom_call.1} parent=1 // pred_check_branch
      %44 = sbr.rel (0) target = $region17
    $region16: #{tpu_custom_call.1} parent=1 // pred_region
      %46 = dma.done [#allocation7], 2048
    $region17: #{tpu_custom_call.1} parent=1 // pred_fallthru
      _
    %p47 = scmp.eq.s32.totalorder 0, 0
    // Predicated region
    $region18: #{tpu_custom_call.1} parent=1 // pred_check
      %p48 = pneg %p47
    $region19: #{tpu_custom_call.1} parent=1 // pred_check_branch
      %50 = sbr.rel (%p48) target = $region21
    $region20: #{tpu_custom_call.1} parent=1 // pred_region
      %51 = vst [vmem:[#allocation8] sm:$0xff] 0.0
      %52 = vst [vmem:[#allocation8 + $0x8] sm:$0xff] 0.0
      %53 = vst [vmem:[#allocation8 + $0x10] sm:$0xff] 0.0
      %54 = vst [vmem:[#allocation8 + $0x18] sm:$0xff] 0.0
      %55 = vst [vmem:[#allocation8 + $0x20] sm:$0xff] 0.0
      %56 = vst [vmem:[#allocation8 + $0x28] sm:$0xff] 0.0
      %57 = vst [vmem:[#allocation8 + $0x30] sm:$0xff] 0.0
      %58 = vst [vmem:[#allocation8 + $0x38] sm:$0xff] 0.0
      %59 = vst [vmem:[#allocation8 + $0x40] sm:$0xff] 0.0
      %60 = vst [vmem:[#allocation8 + $0x48] sm:$0xff] 0.0
      %61 = vst [vmem:[#allocation8 + $0x50] sm:$0xff] 0.0
      %62 = vst [vmem:[#allocation8 + $0x58] sm:$0xff] 0.0
      %63 = vst [vmem:[#allocation8 + $0x60] sm:$0xff] 0.0
      %64 = vst [vmem:[#allocation8 + $0x68] sm:$0xff] 0.0
      %65 = vst [vmem:[#allocation8 + $0x70] sm:$0xff] 0.0
      %66 = vst [vmem:[#allocation8 + $0x78] sm:$0xff] 0.0
    $region21: #{tpu_custom_call.1} parent=1 // pred_fallthru
      _
    %v67 = vld [vmem:[#allocation2] sm:$0xff]
    %v68 = vld [vmem:[#allocation2 + $0x8] sm:$0xff]
    %v69 = vld [vmem:[#allocation2 + $0x10] sm:$0xff]
    %v70 = vld [vmem:[#allocation2 + $0x18] sm:$0xff]
    %v71 = vld [vmem:[#allocation2 + $0x20] sm:$0xff]
    %v72 = vld [vmem:[#allocation2 + $0x28] sm:$0xff]
    %v73 = vld [vmem:[#allocation2 + $0x30] sm:$0xff]
    %v74 = vld [vmem:[#allocation2 + $0x38] sm:$0xff]
    %v75 = vld [vmem:[#allocation2 + $0x40] sm:$0xff]
    %v76 = vld [vmem:[#allocation2 + $0x48] sm:$0xff]
    %v77 = vld [vmem:[#allocation2 + $0x50] sm:$0xff]
    %v78 = vld [vmem:[#allocation2 + $0x58] sm:$0xff]
    %v79 = vld [vmem:[#allocation2 + $0x60] sm:$0xff]
    %v80 = vld [vmem:[#allocation2 + $0x68] sm:$0xff]
    %v81 = vld [vmem:[#allocation2 + $0x70] sm:$0xff]
    %v82 = vld [vmem:[#allocation2 + $0x78] sm:$0xff]
    %v83 = vld [vmem:[#allocation8] sm:$0xff]
    %v84 = vld [vmem:[#allocation8 + $0x8] sm:$0xff]
    %v85 = vld [vmem:[#allocation8 + $0x10] sm:$0xff]
    %v86 = vld [vmem:[#allocation8 + $0x18] sm:$0xff]
    %v87 = vld [vmem:[#allocation8 + $0x20] sm:$0xff]
    %v88 = vld [vmem:[#allocation8 + $0x28] sm:$0xff]
    %v89 = vld [vmem:[#allocation8 + $0x30] sm:$0xff]
    %v90 = vld [vmem:[#allocation8 + $0x38] sm:$0xff]
    %v91 = vld [vmem:[#allocation8 + $0x40] sm:$0xff]
    %v92 = vld [vmem:[#allocation8 + $0x48] sm:$0xff]
    %v93 = vld [vmem:[#allocation8 + $0x50] sm:$0xff]
    %v94 = vld [vmem:[#allocation8 + $0x58] sm:$0xff]
    %v95 = vld [vmem:[#allocation8 + $0x60] sm:$0xff]
    %v96 = vld [vmem:[#allocation8 + $0x68] sm:$0xff]
    %v97 = vld [vmem:[#allocation8 + $0x70] sm:$0xff]
    %v98 = vld [vmem:[#allocation8 + $0x78] sm:$0xff]
    %v115 = vunpack.c.l.b16 %v67
    %v116 = vunpack.c.h.b16 %v67
    %v117 = vunpack.c.l.b16 %v68
    %v118 = vunpack.c.h.b16 %v68
    %v119 = vunpack.c.l.b16 %v69
    %v120 = vunpack.c.h.b16 %v69
    %v121 = vunpack.c.l.b16 %v70
    %v122 = vunpack.c.h.b16 %v70
    %v123 = vunpack.c.l.b16 %v71
    %v124 = vunpack.c.h.b16 %v71
    %v125 = vunpack.c.l.b16 %v72
    %v126 = vunpack.c.h.b16 %v72
    %v127 = vunpack.c.l.b16 %v73
    %v128 = vunpack.c.h.b16 %v73
    %v129 = vunpack.c.l.b16 %v74
    %v130 = vunpack.c.h.b16 %v74
    %v131 = vunpack.c.l.b16 %v75
    %v132 = vunpack.c.h.b16 %v75
    %v133 = vunpack.c.l.b16 %v76
    %v134 = vunpack.c.h.b16 %v76
    %v135 = vunpack.c.l.b16 %v77
    %v136 = vunpack.c.h.b16 %v77
    %v137 = vunpack.c.l.b16 %v78
    %v138 = vunpack.c.h.b16 %v78
    %v139 = vunpack.c.l.b16 %v79
    %v140 = vunpack.c.h.b16 %v79
    %v141 = vunpack.c.l.b16 %v80
    %v142 = vunpack.c.h.b16 %v80
    %v143 = vunpack.c.l.b16 %v81
    %v144 = vunpack.c.h.b16 %v81
    %v145 = vunpack.c.l.b16 %v82
    %v146 = vunpack.c.h.b16 %v82
    %v147 = vpack.c.b16 %v117, %v115
    %v148 = vpack.c.b16 %v118, %v116
    %v149 = vpack.c.b16 %v121, %v119
    %v150 = vpack.c.b16 %v122, %v120
    %v151 = vpack.c.b16 %v125, %v123
    %v152 = vpack.c.b16 %v126, %v124
    %v153 = vpack.c.b16 %v129, %v127
    %v154 = vpack.c.b16 %v130, %v128
    %v155 = vpack.c.b16 %v133, %v131
    %v156 = vpack.c.b16 %v134, %v132
    %v157 = vpack.c.b16 %v137, %v135
    %v158 = vpack.c.b16 %v138, %v136
    %v159 = vpack.c.b16 %v141, %v139
    %v160 = vpack.c.b16 %v142, %v140
    %v161 = vpack.c.b16 %v145, %v143
    %v162 = vpack.c.b16 %v146, %v144
    %179 = vmatpush.bf16.xpose.msra.mxu0 %v161
    %180 = vmatpush.bf16.xpose.msra.mxu0 %v159
    %181 = vmatpush.bf16.xpose.msra.mxu0 %v157
    %182 = vmatpush.bf16.xpose.msra.mxu0 %v155
    %183 = vmatpush.bf16.xpose.msra.mxu0 %v153
    %184 = vmatpush.bf16.xpose.msra.mxu0 %v151
    %185 = vmatpush.bf16.xpose.msra.mxu0 %v149
    %186 = vmatpush.bf16.xpose.msra.mxu0 %v147
    %187 = vmatmul.bf16.gmra.mxu0 %v147
    %v188 = vpop.f32.mrf.mxu0
    %v189 = vadd.f32 0.0, %v188
    %v190 = vpop.f32.mrf.mxu0
    %v191 = vadd.f32 0.0, %v190
    %192 = vmatmul.bf16.gmra.mxu0 %v149
    %v193 = vpop.f32.mrf.mxu0
    %v194 = vadd.f32 0.0, %v193
    %v195 = vpop.f32.mrf.mxu0
    %v196 = vadd.f32 0.0, %v195
    %197 = vmatmul.bf16.gmra.mxu0 %v151
    %v198 = vpop.f32.mrf.mxu0
    %v199 = vadd.f32 0.0, %v198
    %v200 = vpop.f32.mrf.mxu0
    %v201 = vadd.f32 0.0, %v200
    %202 = vmatmul.bf16.gmra.mxu0 %v153
    %v203 = vpop.f32.mrf.mxu0
    %v204 = vadd.f32 0.0, %v203
    %v205 = vpop.f32.mrf.mxu0
    %v206 = vadd.f32 0.0, %v205
    %207 = vmatmul.bf16.gmra.mxu0 %v155
    %v208 = vpop.f32.mrf.mxu0
    %v209 = vadd.f32 0.0, %v208
    %v210 = vpop.f32.mrf.mxu0
    %v211 = vadd.f32 0.0, %v210
    %212 = vmatmul.bf16.gmra.mxu0 %v157
    %v213 = vpop.f32.mrf.mxu0
    %v214 = vadd.f32 0.0, %v213
    %v215 = vpop.f32.mrf.mxu0
    %v216 = vadd.f32 0.0, %v215
    %217 = vmatmul.bf16.gmra.mxu0 %v159
    %v218 = vpop.f32.mrf.mxu0
    %v219 = vadd.f32 0.0, %v218
    %v220 = vpop.f32.mrf.mxu0
    %v221 = vadd.f32 0.0, %v220
    %222 = vmatmul.bf16.gmra.mxu0 %v161
    %v223 = vpop.f32.mrf.mxu0
    %v224 = vadd.f32 0.0, %v223
    %v225 = vpop.f32.mrf.mxu0
    %v226 = vadd.f32 0.0, %v225
    %227 = vdwg.mxu0
    %228 = vmatpush.bf16.xpose.msra.mxu0 %v162
    %229 = vmatpush.bf16.xpose.msra.mxu0 %v160
    %230 = vmatpush.bf16.xpose.msra.mxu0 %v158
    %231 = vmatpush.bf16.xpose.msra.mxu0 %v156
    %232 = vmatpush.bf16.xpose.msra.mxu0 %v154
    %233 = vmatpush.bf16.xpose.msra.mxu0 %v152
    %234 = vmatpush.bf16.xpose.msra.mxu0 %v150
    %235 = vmatpush.bf16.xpose.msra.mxu0 %v148
    %236 = vmatmul.bf16.gmra.mxu0 %v148
    %v237 = vpop.f32.mrf.mxu0
    %v238 = vadd.f32 %v189, %v237
    %v239 = vpop.f32.mrf.mxu0
    %v240 = vadd.f32 %v191, %v239
    %241 = vmatmul.bf16.gmra.mxu0 %v150
    %v242 = vpop.f32.mrf.mxu0
    %v243 = vadd.f32 %v194, %v242
    %v244 = vpop.f32.mrf.mxu0
    %v245 = vadd.f32 %v196, %v244
    %246 = vmatmul.bf16.gmra.mxu0 %v152
    %v247 = vpop.f32.mrf.mxu0
    %v248 = vadd.f32 %v199, %v247
    %v249 = vpop.f32.mrf.mxu0
    %v250 = vadd.f32 %v201, %v249
    %251 = vmatmul.bf16.gmra.mxu0 %v154
    %v252 = vpop.f32.mrf.mxu0
    %v253 = vadd.f32 %v204, %v252
    %v254 = vpop.f32.mrf.mxu0
    %v255 = vadd.f32 %v206, %v254
    %256 = vmatmul.bf16.gmra.mxu0 %v156
    %v257 = vpop.f32.mrf.mxu0
    %v258 = vadd.f32 %v209, %v257
    %v259 = vpop.f32.mrf.mxu0
    %v260 = vadd.f32 %v211, %v259
    %261 = vmatmul.bf16.gmra.mxu0 %v158
    %v262 = vpop.f32.mrf.mxu0
    %v263 = vadd.f32 %v214, %v262
    %v264 = vpop.f32.mrf.mxu0
    %v265 = vadd.f32 %v216, %v264
    %266 = vmatmul.bf16.gmra.mxu0 %v160
    %v267 = vpop.f32.mrf.mxu0
    %v268 = vadd.f32 %v219, %v267
    %v269 = vpop.f32.mrf.mxu0
    %v270 = vadd.f32 %v221, %v269
    %271 = vmatmul.bf16.gmra.mxu0 %v162
    %v272 = vpop.f32.mrf.mxu0
    %v273 = vadd.f32 %v224, %v272
    %v274 = vpop.f32.mrf.mxu0
    %v275 = vadd.f32 %v226, %v274
    %276 = vdwg.mxu0
    %v277 = vadd.f32 %v83, %v238
    %v278 = vadd.f32 %v84, %v240
    %v279 = vadd.f32 %v85, %v243
    %v280 = vadd.f32 %v86, %v245
    %v281 = vadd.f32 %v87, %v248
    %v282 = vadd.f32 %v88, %v250
    %v283 = vadd.f32 %v89, %v253
    %v284 = vadd.f32 %v90, %v255
    %v285 = vadd.f32 %v91, %v258
    %v286 = vadd.f32 %v92, %v260
    %v287 = vadd.f32 %v93, %v263
    %v288 = vadd.f32 %v94, %v265
    %v289 = vadd.f32 %v95, %v268
    %v290 = vadd.f32 %v96, %v270
    %v291 = vadd.f32 %v97, %v273
    %v292 = vadd.f32 %v98, %v275
    %293 = vst [vmem:[#allocation8] sm:$0xff] %v277
    %294 = vst [vmem:[#allocation8 + $0x8] sm:$0xff] %v278
    %295 = vst [vmem:[#allocation8 + $0x10] sm:$0xff] %v279
    %296 = vst [vmem:[#allocation8 + $0x18] sm:$0xff] %v280
    %297 = vst [vmem:[#allocation8 + $0x20] sm:$0xff] %v281
    %298 = vst [vmem:[#allocation8 + $0x28] sm:$0xff] %v282
    %299 = vst [vmem:[#allocation8 + $0x30] sm:$0xff] %v283
    %300 = vst [vmem:[#allocation8 + $0x38] sm:$0xff] %v284
    %301 = vst [vmem:[#allocation8 + $0x40] sm:$0xff] %v285
    %302 = vst [vmem:[#allocation8 + $0x48] sm:$0xff] %v286
    %303 = vst [vmem:[#allocation8 + $0x50] sm:$0xff] %v287
    %304 = vst [vmem:[#allocation8 + $0x58] sm:$0xff] %v288
    %305 = vst [vmem:[#allocation8 + $0x60] sm:$0xff] %v289
    %306 = vst [vmem:[#allocation8 + $0x68] sm:$0xff] %v290
    %307 = vst [vmem:[#allocation8 + $0x70] sm:$0xff] %v291
    %308 = vst [vmem:[#allocation8 + $0x78] sm:$0xff] %v292
    // Predicated region
    $region22: #{tpu_custom_call.1} parent=1 // pred_check
      %p309 = pneg %p47
    $region23: #{tpu_custom_call.1} parent=1 // pred_check_branch
      %311 = sbr.rel (%p309) target = $region25
    $region24: #{tpu_custom_call.1} parent=1 // pred_region
      %v312 = vld [vmem:[#allocation8] sm:$0xff]
      %v313 = vld [vmem:[#allocation8 + $0x8] sm:$0xff]
      %v314 = vld [vmem:[#allocation8 + $0x10] sm:$0xff]
      %v315 = vld [vmem:[#allocation8 + $0x18] sm:$0xff]
      %v316 = vld [vmem:[#allocation8 + $0x20] sm:$0xff]
      %v317 = vld [vmem:[#allocation8 + $0x28] sm:$0xff]
      %v318 = vld [vmem:[#allocation8 + $0x30] sm:$0xff]
      %v319 = vld [vmem:[#allocation8 + $0x38] sm:$0xff]
      %v320 = vld [vmem:[#allocation8 + $0x40] sm:$0xff]
      %v321 = vld [vmem:[#allocation8 + $0x48] sm:$0xff]
      %v322 = vld [vmem:[#allocation8 + $0x50] sm:$0xff]
      %v323 = vld [vmem:[#allocation8 + $0x58] sm:$0xff]
      %v324 = vld [vmem:[#allocation8 + $0x60] sm:$0xff]
      %v325 = vld [vmem:[#allocation8 + $0x68] sm:$0xff]
      %v326 = vld [vmem:[#allocation8 + $0x70] sm:$0xff]
      %v327 = vld [vmem:[#allocation8 + $0x78] sm:$0xff]
      %v328 = vmul.f32 %v312, 0.00048828125
      %v329 = vmul.f32 %v313, 0.00048828125
      %v330 = vmul.f32 %v314, 0.00048828125
      %v331 = vmul.f32 %v315, 0.00048828125
      %v332 = vmul.f32 %v316, 0.00048828125
      %v333 = vmul.f32 %v317, 0.00048828125
      %v334 = vmul.f32 %v318, 0.00048828125
      %v335 = vmul.f32 %v319, 0.00048828125
      %v336 = vmul.f32 %v320, 0.00048828125
      %v337 = vmul.f32 %v321, 0.00048828125
      %v338 = vmul.f32 %v322, 0.00048828125
      %v339 = vmul.f32 %v323, 0.00048828125
      %v340 = vmul.f32 %v324, 0.00048828125
      %v341 = vmul.f32 %v325, 0.00048828125
      %v342 = vmul.f32 %v326, 0.00048828125
      %v343 = vmul.f32 %v327, 0.00048828125
      %344 = vst [vmem:[#allocation8] sm:$0xff] %v328
      %345 = vst [vmem:[#allocation8 + $0x8] sm:$0xff] %v329
      %346 = vst [vmem:[#allocation8 + $0x10] sm:$0xff] %v330
      %347 = vst [vmem:[#allocation8 + $0x18] sm:$0xff] %v331
      %348 = vst [vmem:[#allocation8 + $0x20] sm:$0xff] %v332
      %349 = vst [vmem:[#allocation8 + $0x28] sm:$0xff] %v333
      %350 = vst [vmem:[#allocation8 + $0x30] sm:$0xff] %v334
      %351 = vst [vmem:[#allocation8 + $0x38] sm:$0xff] %v335
      %352 = vst [vmem:[#allocation8 + $0x40] sm:$0xff] %v336
      %353 = vst [vmem:[#allocation8 + $0x48] sm:$0xff] %v337
      %354 = vst [vmem:[#allocation8 + $0x50] sm:$0xff] %v338
      %355 = vst [vmem:[#allocation8 + $0x58] sm:$0xff] %v339
      %356 = vst [vmem:[#allocation8 + $0x60] sm:$0xff] %v340
      %357 = vst [vmem:[#allocation8 + $0x68] sm:$0xff] %v341
      %358 = vst [vmem:[#allocation8 + $0x70] sm:$0xff] %v342
      %359 = vst [vmem:[#allocation8 + $0x78] sm:$0xff] %v343
      %v360 = vld [vmem:[#allocation6] sm:$0xff]
      %v361 = vld [vmem:[#allocation6 + $0x8] sm:$0xff]
      %v362 = vld [vmem:[#allocation6 + $0x10] sm:$0xff]
      %v363 = vld [vmem:[#allocation6 + $0x18] sm:$0xff]
      %v364 = vld [vmem:[#allocation6 + $0x20] sm:$0xff]
      %v365 = vld [vmem:[#allocation6 + $0x28] sm:$0xff]
      %v366 = vld [vmem:[#allocation6 + $0x30] sm:$0xff]
      %v367 = vld [vmem:[#allocation6 + $0x38] sm:$0xff]
      %v368 = vld [vmem:[#allocation6 + $0x40] sm:$0xff]
      %v369 = vld [vmem:[#allocation6 + $0x48] sm:$0xff]
      %v370 = vld [vmem:[#allocation6 + $0x50] sm:$0xff]
      %v371 = vld [vmem:[#allocation6 + $0x58] sm:$0xff]
      %v372 = vld [vmem:[#allocation6 + $0x60] sm:$0xff]
      %v373 = vld [vmem:[#allocation6 + $0x68] sm:$0xff]
      %v374 = vld [vmem:[#allocation6 + $0x70] sm:$0xff]
      %v375 = vld [vmem:[#allocation6 + $0x78] sm:$0xff]
      %v376 = vsub.f32 %v328, %v360
      %v377 = vsub.f32 %v329, %v361
      %v378 = vsub.f32 %v330, %v362
      %v379 = vsub.f32 %v331, %v363
      %v380 = vsub.f32 %v332, %v364
      %v381 = vsub.f32 %v333, %v365
      %v382 = vsub.f32 %v334, %v366
      %v383 = vsub.f32 %v335, %v367
      %v384 = vsub.f32 %v336, %v368
      %v385 = vsub.f32 %v337, %v369
      %v386 = vsub.f32 %v338, %v370
      %v387 = vsub.f32 %v339, %v371
      %v388 = vsub.f32 %v340, %v372
      %v389 = vsub.f32 %v341, %v373
      %v390 = vsub.f32 %v342, %v374
      %v391 = vsub.f32 %v343, %v375
      %v392 = vmul.f32 %v376, %v376
      %v393 = vmul.f32 %v377, %v377
      %v394 = vmul.f32 %v378, %v378
      %v395 = vmul.f32 %v379, %v379
      %v396 = vmul.f32 %v380, %v380
      %v397 = vmul.f32 %v381, %v381
      %v398 = vmul.f32 %v382, %v382
      %v399 = vmul.f32 %v383, %v383
      %v400 = vmul.f32 %v384, %v384
      %v401 = vmul.f32 %v385, %v385
      %v402 = vmul.f32 %v386, %v386
      %v403 = vmul.f32 %v387, %v387
      %v404 = vmul.f32 %v388, %v388
      %v405 = vmul.f32 %v389, %v389
      %v406 = vmul.f32 %v390, %v390
      %v407 = vmul.f32 %v391, %v391
      %v408 = vadd.f32 %v392, %v393
      %v409 = vadd.f32 %v408, %v394
      %v410 = vadd.f32 %v409, %v395
      %v411 = vadd.f32 %v410, %v396
      %v412 = vadd.f32 %v411, %v397
      %v413 = vadd.f32 %v412, %v398
      %v414 = vadd.f32 %v413, %v399
      %v415 = vadd.f32 %v414, %v400
      %v416 = vadd.f32 %v415, %v401
      %v417 = vadd.f32 %v416, %v402
      %v418 = vadd.f32 %v417, %v403
      %v419 = vadd.f32 %v418, %v404
      %v420 = vadd.f32 %v419, %v405
      %v421 = vadd.f32 %v420, %v406
      %v422 = vadd.f32 %v421, %v407
      %423 = vadd.xlane.f32.xlu0 %v422
      %v424 = vpop.xlane.xlu0 %423
      %v425 = vrot.slane %v424, 4
      %v426 = vadd.f32 %v424, %v425
      %v427 = vrot.slane %v426, 2
      %v428 = vadd.f32 %v426, %v427
      %v429 = vrot.slane %v428, 1
      %v430 = vadd.f32 %v428, %v429
      %s431 = vtos %v430
      %s432 = smul.f32 %s431, 0.015625
      %s433 = scalar_lea.smem [#allocation9], 0
      %434 = sst [smem:[%s433]] %s432
    $region25: #{tpu_custom_call.1} parent=1 // pred_fallthru
      _
    // Predicated region
    $region26: #{tpu_custom_call.1} parent=1 // pred_check
      _
    $region27: #{tpu_custom_call.1} parent=1 // pred_check_branch
      %436 = sbr.rel (0) target = $region29
    $region28: #{tpu_custom_call.1} parent=1 // pred_region
      %438 = vsyncadd [#allocation4], 0
      %s439 = sshll.u32 [#allocation8], 4
      %s440 = int_to_ptr.vmem [resolvable:$true] %s439
      %s441 = sshll.u32 %s2, 4
      %s442 = int_to_ptr.hbm [resolvable:$true] %s441
      %447 = dma.vmem_to_hbm [thread:$0]  %s440, 2048, %s442, [#allocation4], 128, 128, 8
    $region29: #{tpu_custom_call.1} parent=1 // pred_fallthru
      _
    // Predicated region
    $region30: #{tpu_custom_call.1} parent=1 // pred_check
      _
    $region31: #{tpu_custom_call.1} parent=1 // pred_check_branch
      %449 = sbr.rel (0) target = $region33
    $region32: #{tpu_custom_call.1} parent=1 // pred_region
      %451 = vsyncadd [#allocation5], 0
      %s453 = sshll.u32 %s3, 4
      %s454 = int_to_ptr.hbm [resolvable:$true] %s453
      %456 = dma.smem_to_hbm [#allocation9], 16, %s454, [#allocation5]
    $region33: #{tpu_custom_call.1} parent=1 // pred_fallthru
      _
    // Predicated region
    $region34: #{tpu_custom_call.1} parent=1 // pred_check
      _
    $region35: #{tpu_custom_call.1} parent=1 // pred_check_branch
      %458 = sbr.rel (0) target = $region37
    $region36: #{tpu_custom_call.1} parent=1 // pred_region
      %460 = dma.done [#allocation4], 2048
    $region37: #{tpu_custom_call.1} parent=1 // pred_fallthru
      _
    // Predicated region
    $region38: #{tpu_custom_call.1} parent=1 // pred_check
      _
    $region39: #{tpu_custom_call.1} parent=1 // pred_check_branch
      %462 = sbr.rel (0) target = $region41
    $region40: #{tpu_custom_call.1} parent=1 // pred_region
      %464 = dma.done [#allocation5], 16
    $region41: #{tpu_custom_call.1} parent=1 // pred_fallthru
      _
    %465 = sfence
    %466 = vsyncpa [#allocation3], 1
    %467 = vsyncpa [#allocation7], 1
    %468 = vsyncpa [#allocation4], 1
    %469 = vsyncpa [#allocation5], 1

</llo_original>
